<compile_context>
chip_gen: v5e
topology: v5e:2x2
jax: 0.10.0
libtpu: 0.0.40
codegen_flags: <defaults>
</compile_context>

<pallas_src>
import math

import jax
import jax.numpy as jnp
from jax.experimental import pallas as pl
from jax.experimental.pallas import tpu as pltpu


# ---------------------------------------------------------------------------
# 1) Document-invariant label-graph GCN, computed ONCE (hoisted out of the
#    per-document grid).  Operands arrive pre-transposed so the kernel emits
#    le2^T = (adj @ lrelu(adj @ (E @ W3)) @ W4)^T  of shape (D, L) directly,
#    already in the streaming dtype — no extra XLA transpose round trip.
#      s3^T = W3^T @ E^T ; g3^T = s3^T @ adj^T ; s4^T = W4^T @ lrelu(g3^T)
#      le2^T = s4^T @ adj^T
# ---------------------------------------------------------------------------
def _label_gcn_kernel(labT_ref, adjT_ref, w3T_ref, w4T_ref, out_ref):
    adjT = adjT_ref[...]                                              # (L, L)
    s3T = jnp.dot(w3T_ref[...], labT_ref[...],
                  preferred_element_type=jnp.float32)                 # (D, L)
    g3T = jnp.dot(s3T, adjT, preferred_element_type=jnp.float32)      # (D, L)
    g3T = jnp.where(g3T >= 0, g3T, 0.2 * g3T)                         # LeakyReLU(0.2)
    s4T = jnp.dot(w4T_ref[...], g3T, preferred_element_type=jnp.float32)
    le2T = jnp.dot(s4T, adjT, preferred_element_type=jnp.float32)     # (D, L)
    out_ref[...] = le2T.astype(out_ref.dtype)


# ---------------------------------------------------------------------------
# 2) Per-document attention + pooling + classifier.
#    grid = (document, seq_tile); h_enc accumulated in VMEM scratch over seq.
# ---------------------------------------------------------------------------
def _bert_doc_kernel(tok_ref, kg_ref, pooled_ref, le2t_ref, wch_ref, wcp_ref,
                     bc_ref, out_ref, acc_ref):
    s_idx = pl.program_id(1)

    @pl.when(s_idx == 0)
    def _init():
        acc_ref[...] = jnp.zeros_like(acc_ref)

    # doc stays in the streaming dtype (bf16 when the producer emits bf16) all
    # the way through the MXU: bf16 add + bf16 matmul with f32 accumulation.
    doc = tok_ref[0] + kg_ref[0]                                      # (B, tS, D)
    nb, ns, nd = doc.shape

    # word-label attention as one fat 2-D MXU matmul (M = B*tS).
    doc2d = doc.reshape(nb * ns, nd)                                  # (B*tS, D)
    att = jnp.dot(doc2d, le2t_ref[...],
                  preferred_element_type=jnp.float32)                 # (B*tS, L)
    att = att.reshape(nb, ns, -1)                                     # (B, tS, L)
    w = jnp.tanh(jnp.max(att, axis=-1, keepdims=True))                # (B, tS, 1) f32

    # weighted S-reduction on the VPU/XLU (MXU is busy with the attention
    # matmul; only this product is upcast to f32 for the accumulator).
    acc_ref[...] += jnp.sum(w * doc.astype(jnp.float32), axis=1)      # (B, D)

    @pl.when(s_idx == pl.num_programs(1) - 1)
    def _finalize():
        # 1/S (mean over seq) is pre-folded into wch; classifier on
        # cat([h_enc, pooled]) via split (pre-padded) weights.
        logits = (jnp.dot(acc_ref[...], wch_ref[...],
                          preferred_element_type=jnp.float32)
                  + jnp.dot(pooled_ref[0].astype(jnp.float32), wcp_ref[...],
                            preferred_element_type=jnp.float32)
                  + bc_ref[...])                                      # (B, Lp)
        # torch.max(logits, dim=0, keepdim=True)[0]  -> lane-dense (1, Lp) store
        # TODO(synk): if B is padded to a fixed segment count, padded rows must
        # be masked to -inf before this max (they are real rows in this test).
        out_ref[...] = jnp.max(logits, axis=0, keepdims=True)


def bert_class_forward(token_emb, kg, pooled, label_emb, label_adj,
                       w3, w4, wc, bc, *, seq_tile=512):
    num_docs, B, S, D = token_emb.shape
    L = label_emb.shape[0]
    Lp = ((L + 127) // 128) * 128          # lane-dense classifier/output width

    # Stream the two big activation tensors in whatever dtype the producer
    # emitted (bf16 recommended) — no standalone cast sweep in the wrapper.
    stream_dtype = token_emb.dtype
    assert kg.dtype == stream_dtype, (token_emb.dtype, kg.dtype)

    # --- hoisted label GCN: one tiny one-shot pallas_call, output is already
    #     transposed (D, L) and in the streaming dtype for the bf16 MXU path ---
    le2_t = pl.pallas_call(
        _label_gcn_kernel,
        out_shape=jax.ShapeDtypeStruct((D, L), stream_dtype),
    )(jnp.transpose(label_emb), jnp.transpose(label_adj),
      jnp.transpose(w3), jnp.transpose(w4))

    # --- classifier params: split the concat, fold 1/S into the h_enc slice,
    #     and pad the label dim to 128 (lane-dense) -------------------------
    inv_s = 1.0 / float(S)
    pad = ((0, 0), (0, Lp - L))
    wc_h = jnp.pad(wc[:D] * inv_s, pad)    # (D, Lp) acts on the seq-sum accumulator
    wc_p = jnp.pad(wc[D:], pad)            # (D, Lp) acts on bert pooled output
    bc_p = jnp.pad(bc, pad)                # (1, Lp)

    tS = min(seq_tile, S)
    # TODO(synk): S % tS == 0 assumes the producer pads S; the mean then runs
    # over padded positions exactly as the PyTorch mean over the padded tensor.
    assert S % tS == 0, (S, tS)
    n_s = S // tS

    out_padded = pl.pallas_call(
        _bert_doc_kernel,
        out_shape=jax.ShapeDtypeStruct((num_docs, Lp), jnp.float32),
        grid_spec=pltpu.PrefetchScalarGridSpec(
            num_scalar_prefetch=0,
            grid=(num_docs, n_s),
            in_specs=[
                pl.BlockSpec((1, B, tS, D), lambda d, s: (d, 0, s, 0)),  # token_emb (streamed)
                pl.BlockSpec((1, B, tS, D), lambda d, s: (d, 0, s, 0)),  # kg        (streamed)
                pl.BlockSpec((1, B, D), lambda d, s: (d, 0, 0)),         # bert pooled
                pl.BlockSpec((D, L), lambda d, s: (0, 0)),               # le2^T (invariant)
                pl.BlockSpec((D, Lp), lambda d, s: (0, 0)),              # classifier W (h_enc, /S folded)
                pl.BlockSpec((D, Lp), lambda d, s: (0, 0)),              # classifier W (pooled part)
                pl.BlockSpec((1, Lp), lambda d, s: (0, 0)),              # classifier b
            ],
            out_specs=pl.BlockSpec((1, Lp), lambda d, s: (d, 0)),
            scratch_shapes=[pltpu.VMEM((B, D), jnp.float32)],            # h_enc accumulator
        ),
        compiler_params=pltpu.CompilerParams(
            # doc axis "parallel": on v7x the documents shard across both TCs.
            dimension_semantics=("parallel", "arbitrary"),
            # sized for tS=512 double-buffered bf16 tiles at real D=768 with
            # headroom under v7x's 64 MiB physical VMEM.
            vmem_limit_bytes=40 * 1024 * 1024,
        ),
    )(token_emb, kg, pooled, le2_t, wc_h, wc_p, bc_p)

    return out_padded[:, :L]


# ---------------------------------------------------------------------------
# Pure-JAX reference mirroring the PyTorch forward (per document), routed
# through the same streaming precision the kernel uses (bf16 doc / bf16 le).
# ---------------------------------------------------------------------------
def reference_forward(token_emb, kg, pooled, label_emb, label_adj, w3, w4, wc, bc):
    le = label_adj @ (label_emb @ w3)
    le = jnp.where(le >= 0, le, 0.2 * le)
    le = label_adj @ (le @ w4)                                   # (L, D) f32
    le_s = le.astype(token_emb.dtype).astype(jnp.float32)        # kernel streaming precision
    preds = []
    for d in range(token_emb.shape[0]):
        doc = (token_emb[d] + kg[d]).astype(jnp.float32)         # (B, S, D)
        att = jnp.einsum('bsd,ld->bsl', doc, le_s)
        att_v = jnp.max(att, axis=-1, keepdims=True)
        h_enc = jnp.mean(jnp.tanh(att_v) * doc, axis=1)          # (B, D)
        concat = jnp.concatenate([h_enc, pooled[d].astype(jnp.float32)], axis=1)
        logits = concat @ wc + bc
        preds.append(jnp.max(logits, axis=0, keepdims=True))
    return jnp.concatenate(preds, axis=0)


if __name__ == "__main__":
    # TODO(synk): BERT encoder, id==102 segmentation/padding, and kg_dict lookup
    # are host-side / pretrained components; their outputs are synthesized here
    # (producer emits bf16 activations so the bf16 streaming is end-to-end).
    # TODO(synk): nn.Dropout modeled as identity (inference mode).
    NUM_DOCS = 2    # len(ids): outer document loop (even -> balances v7x's 2 TCs)
    B_SEG = 2       # segments per document (stacked_tensor batch)
    S = 1024        # padded segment length (2 seq tiles of 512 -> exercises accumulator)
    D = 128         # hidden dim (768 in the real module)
    L = 16          # num_labels == label-graph nodes

    key = jax.random.PRNGKey(0)
    ks = jax.random.split(key, 9)

    token_emb = jax.random.normal(ks[0], (NUM_DOCS, B_SEG, S, D), jnp.bfloat16) * 0.5
    kg = jax.random.normal(ks[1], (NUM_DOCS, B_SEG, S, D), jnp.bfloat16) * 0.1
    pooled = jax.random.normal(ks[2], (NUM_DOCS, B_SEG, D), jnp.float32) * 0.5

    label_emb = jax.random.normal(ks[3], (L, D), jnp.float32) * 0.1
    label_adj = jax.random.uniform(ks[4], (L, L), jnp.float32)
    stdv = 1.0 / math.sqrt(D)
    w3 = jax.random.uniform(ks[5], (D, D), jnp.float32, -stdv, stdv)
    w4 = jax.random.uniform(ks[6], (D, D), jnp.float32, -stdv, stdv)
    bound = 1.0 / math.sqrt(2 * D)
    wc = jax.random.uniform(ks[7], (2 * D, L), jnp.float32, -bound, bound)
    bc = jax.random.uniform(ks[8], (1, L), jnp.float32, -bound, bound)

    out = bert_class_forward(token_emb, kg, pooled, label_emb, label_adj,
                             w3, w4, wc, bc)
    out = jax.block_until_ready(out)
    assert out.shape == (NUM_DOCS, L), out.shape

    ref = reference_forward(token_emb, kg, pooled, label_emb, label_adj,
                            w3, w4, wc, bc)
    assert jnp.allclose(out, ref, rtol=2e-2, atol=2e-2), (out, ref)

    print("KERNEL_OK")
</pallas_src>

<mosaic_0001>
module attributes {stable_mosaic.version = 11 : i64} {
  func.func @_label_gcn_kernel(%arg0: memref<128x16xf32, #tpu.memory_space<vmem>>, %arg1: memref<16x16xf32, #tpu.memory_space<vmem>>, %arg2: memref<128x128xf32, #tpu.memory_space<vmem>>, %arg3: memref<128x128xf32, #tpu.memory_space<vmem>>, %arg4: memref<128x16xbf16, #tpu.memory_space<vmem>>) attributes {dimension_semantics = [], scalar_prefetch = 0 : i64, scratch_operands = 0 : i64, tpu.core_type = #tpu.core_type<tc>} {
    %c0 = arith.constant 0 : index
    %c0_0 = arith.constant 0 : index
    %0 = vector.load %arg1[%c0, %c0_0] : memref<16x16xf32, #tpu.memory_space<vmem>>, vector<16x16xf32>
    %c0_1 = arith.constant 0 : index
    %c0_2 = arith.constant 0 : index
    %1 = vector.load %arg2[%c0_1, %c0_2] : memref<128x128xf32, #tpu.memory_space<vmem>>, vector<128x128xf32>
    %c0_3 = arith.constant 0 : index
    %c0_4 = arith.constant 0 : index
    %2 = vector.load %arg0[%c0_3, %c0_4] : memref<128x16xf32, #tpu.memory_space<vmem>>, vector<128x16xf32>
    %cst = arith.constant dense<0.000000e+00> : vector<128x16xf32>
    %3 = tpu.matmul %1, %2, %cst {dimension_numbers = #tpu.dot_dimension_numbers<[1], [0], [0], [1], [0, 0, 1, 1], [], []>} : vector<128x128xf32>, vector<128x16xf32>, vector<128x16xf32> -> vector<128x16xf32>
    %cst_5 = arith.constant dense<0.000000e+00> : vector<128x16xf32>
    %4 = tpu.matmul %3, %0, %cst_5 {dimension_numbers = #tpu.dot_dimension_numbers<[1], [0], [0], [1], [0, 0, 1, 1], [], []>} : vector<128x16xf32>, vector<16x16xf32>, vector<128x16xf32> -> vector<128x16xf32>
    %cst_6 = arith.constant 0.000000e+00 : f32
    %5 = vector.broadcast %cst_6 : f32 to vector<128x16xf32>
    %6 = arith.cmpf oge, %4, %5 : vector<128x16xf32>
    %cst_7 = arith.constant 2.000000e-01 : f32
    %7 = vector.broadcast %cst_7 : f32 to vector<128x16xf32>
    %8 = arith.mulf %7, %4 : vector<128x16xf32>
    %9 = arith.select %6, %4, %8 : vector<128x16xi1>, vector<128x16xf32>
    %c0_8 = arith.constant 0 : index
    %c0_9 = arith.constant 0 : index
    %10 = vector.load %arg3[%c0_8, %c0_9] : memref<128x128xf32, #tpu.memory_space<vmem>>, vector<128x128xf32>
    %cst_10 = arith.constant dense<0.000000e+00> : vector<128x16xf32>
    %11 = tpu.matmul %10, %9, %cst_10 {dimension_numbers = #tpu.dot_dimension_numbers<[1], [0], [0], [1], [0, 0, 1, 1], [], []>} : vector<128x128xf32>, vector<128x16xf32>, vector<128x16xf32> -> vector<128x16xf32>
    %cst_11 = arith.constant dense<0.000000e+00> : vector<128x16xf32>
    %12 = tpu.matmul %11, %0, %cst_11 {dimension_numbers = #tpu.dot_dimension_numbers<[1], [0], [0], [1], [0, 0, 1, 1], [], []>} : vector<128x16xf32>, vector<16x16xf32>, vector<128x16xf32> -> vector<128x16xf32>
    %13 = arith.truncf %12 : vector<128x16xf32> to vector<128x16xbf16>
    %c0_12 = arith.constant 0 : index
    %c0_13 = arith.constant 0 : index
    %14 = vector.load %arg4[%c0_12, %c0_13] : memref<128x16xbf16, #tpu.memory_space<vmem>>, vector<128x16xbf16>
    tpu.vector_store %arg4[%c0_12, %c0_13], %13 {strides = array<i32>} : memref<128x16xbf16, #tpu.memory_space<vmem>>, vector<128x16xbf16>,
    return
  }
}

</mosaic_0001>

<llo_original>
// kernel: tpu_custom_call.1
$region0: #{tpu_custom_call.1}
  #allocation0 [shape = 'u32[]', space=smem, size = 0x4, offset = 0x4, fixed_abs, tag = 'smem constant byte address 0x4 - core index']
  #allocation1 [shape = 'u32[72,128]{1,0:T(1,128)}', space=vmem, size = 0x9000, scoped, tag = 'internal scratch']
  %s0 = inlined_call_operand.vmem [shape: f32[128,16], index: 0, kind: input, shape index: {}]
  %s1 = inlined_call_operand.vmem [shape: f32[16,16], index: 1, kind: input, shape index: {}]
  %s2 = inlined_call_operand.vmem [shape: f32[128,128], index: 2, kind: input, shape index: {}]
  %s3 = inlined_call_operand.hbm [shape: f32[128,128], index: 3, kind: input, shape index: {}]
  %s4 = inlined_call_operand.vmem [shape: bf16[128,16], index: 4, kind: output, shape index: {}]
  %s5 = sld [smem:[#allocation0]]
  $region30: #{tpu_custom_call.1} parent=0
    _
  %s7 = ssub.s32 1, %s5
  %s8 = scalar_select 0, %s7, %s5
  $region1: #{tpu_custom_call.1} parent=0
    #allocation2 [shape = 'u8[65536]{0}', space=vmem, size = 0x10000, scoped, tag = 'input window, operand 3, single buffered']
    #allocation3 [shape = 's32[1]{0}', space=sflag, size = 0x4, scoped, tag = 'scoped memory for tpu_custom_call.1']
    %9 = vsyncpa [#allocation3], 0
    // Predicated region
    $region2: #{tpu_custom_call.1} parent=1 // pred_check
      _
    $region3: #{tpu_custom_call.1} parent=1 // pred_check_branch
      %11 = sbr.rel (0) target = $region5
    $region4: #{tpu_custom_call.1} parent=1 // pred_region
      _
    $region5: #{tpu_custom_call.1} parent=1 // pred_fallthru
      _
    // Predicated region
    $region6: #{tpu_custom_call.1} parent=1 // pred_check
      _
    $region7: #{tpu_custom_call.1} parent=1 // pred_check_branch
      %13 = sbr.rel (0) target = $region9
    $region8: #{tpu_custom_call.1} parent=1 // pred_region
      _
    $region9: #{tpu_custom_call.1} parent=1 // pred_fallthru
      _
    // Predicated region
    $region10: #{tpu_custom_call.1} parent=1 // pred_check
      _
    $region11: #{tpu_custom_call.1} parent=1 // pred_check_branch
      %15 = sbr.rel (0) target = $region13
    $region12: #{tpu_custom_call.1} parent=1 // pred_region
      _
    $region13: #{tpu_custom_call.1} parent=1 // pred_fallthru
      _
    // Predicated region
    $region14: #{tpu_custom_call.1} parent=1 // pred_check
      _
    $region15: #{tpu_custom_call.1} parent=1 // pred_check_branch
      %17 = sbr.rel (0) target = $region17
    $region16: #{tpu_custom_call.1} parent=1 // pred_region
      %19 = vsyncadd [#allocation3], 0
      %s20 = sshll.u32 %s3, 4
      %s21 = int_to_ptr.hbm [resolvable:$true] %s20
      %s22 = sshll.u32 [#allocation2], 4
      %s23 = int_to_ptr.vmem [resolvable:$true] %s22
      %28 = dma.hbm_to_vmem [thread:$0]  %s21, 2048, %s23, [#allocation3], 128, 128, 8
    $region17: #{tpu_custom_call.1} parent=1 // pred_fallthru
      _
    // Predicated region
    $region18: #{tpu_custom_call.1} parent=1 // pred_check
      _
    $region19: #{tpu_custom_call.1} parent=1 // pred_check_branch
      %30 = sbr.rel (0) target = $region21
    $region20: #{tpu_custom_call.1} parent=1 // pred_region
      %32 = dma.done [#allocation3], 2048
    $region21: #{tpu_custom_call.1} parent=1 // pred_fallthru
      _
    %v33 = vld [vmem:[%s1] sm:$0xff]
    %v34 = vld [vmem:[%s1 + $0x8] sm:$0xff]
    %v35 = vld [vmem:[%s2] sm:$0xff]
    %v36 = vld [vmem:[%s2 + $0x8] sm:$0xff]
    %v37 = vld [vmem:[%s2 + $0x10] sm:$0xff]
    %v38 = vld [vmem:[%s2 + $0x18] sm:$0xff]
    %v39 = vld [vmem:[%s2 + $0x20] sm:$0xff]
    %v40 = vld [vmem:[%s2 + $0x28] sm:$0xff]
    %v41 = vld [vmem:[%s2 + $0x30] sm:$0xff]
    %v42 = vld [vmem:[%s2 + $0x38] sm:$0xff]
    %v43 = vld [vmem:[%s2 + $0x40] sm:$0xff]
    %v44 = vld [vmem:[%s2 + $0x48] sm:$0xff]
    %v45 = vld [vmem:[%s2 + $0x50] sm:$0xff]
    %v46 = vld [vmem:[%s2 + $0x58] sm:$0xff]
    %v47 = vld [vmem:[%s2 + $0x60] sm:$0xff]
    %v48 = vld [vmem:[%s2 + $0x68] sm:$0xff]
    %v49 = vld [vmem:[%s2 + $0x70] sm:$0xff]
    %v50 = vld [vmem:[%s2 + $0x78] sm:$0xff]
    %v51 = vld [vmem:[%s0] sm:$0xff]
    %v52 = vld [vmem:[%s0 + $0x8] sm:$0xff]
    %v53 = vld [vmem:[%s0 + $0x10] sm:$0xff]
    %v54 = vld [vmem:[%s0 + $0x18] sm:$0xff]
    %v55 = vld [vmem:[%s0 + $0x20] sm:$0xff]
    %v56 = vld [vmem:[%s0 + $0x28] sm:$0xff]
    %v57 = vld [vmem:[%s0 + $0x30] sm:$0xff]
    %v58 = vld [vmem:[%s0 + $0x38] sm:$0xff]
    %v59 = vld [vmem:[%s0 + $0x40] sm:$0xff]
    %v60 = vld [vmem:[%s0 + $0x48] sm:$0xff]
    %v61 = vld [vmem:[%s0 + $0x50] sm:$0xff]
    %v62 = vld [vmem:[%s0 + $0x58] sm:$0xff]
    %v63 = vld [vmem:[%s0 + $0x60] sm:$0xff]
    %v64 = vld [vmem:[%s0 + $0x68] sm:$0xff]
    %v65 = vld [vmem:[%s0 + $0x70] sm:$0xff]
    %v66 = vld [vmem:[%s0 + $0x78] sm:$0xff]
    %67 = vmatpush.msra.mxu0 %v66
    %68 = vmatpush.msra.mxu0 %v65
    %69 = vmatpush.msra.mxu0 %v64
    %70 = vmatpush.msra.mxu0 %v63
    %71 = vmatpush.msra.mxu0 %v62
    %72 = vmatpush.msra.mxu0 %v61
    %73 = vmatpush.msra.mxu0 %v60
    %74 = vmatpush.msra.mxu0 %v59
    %75 = vmatpush.msra.mxu0 %v58
    %76 = vmatpush.msra.mxu0 %v57
    %77 = vmatpush.msra.mxu0 %v56
    %78 = vmatpush.msra.mxu0 %v55
    %79 = vmatpush.msra.mxu0 %v54
    %80 = vmatpush.msra.mxu0 %v53
    %81 = vmatpush.msra.mxu0 %v52
    %82 = vmatpush.msra.mxu0 %v51
    %83 = vmatmul.f32.gmra.mxu0 %v35
    %v84 = vpop.f32.mrf.mxu0
    %v85 = vadd.f32 0.0, %v84
    %86 = vmatmul.f32.gmra.mxu0 %v36
    %v87 = vpop.f32.mrf.mxu0
    %v88 = vadd.f32 0.0, %v87
    %89 = vmatmul.f32.gmra.mxu0 %v37
    %v90 = vpop.f32.mrf.mxu0
    %v91 = vadd.f32 0.0, %v90
    %92 = vmatmul.f32.gmra.mxu0 %v38
    %v93 = vpop.f32.mrf.mxu0
    %v94 = vadd.f32 0.0, %v93
    %95 = vmatmul.f32.gmra.mxu0 %v39
    %v96 = vpop.f32.mrf.mxu0
    %v97 = vadd.f32 0.0, %v96
    %98 = vmatmul.f32.gmra.mxu0 %v40
    %v99 = vpop.f32.mrf.mxu0
    %v100 = vadd.f32 0.0, %v99
    %101 = vmatmul.f32.gmra.mxu0 %v41
    %v102 = vpop.f32.mrf.mxu0
    %v103 = vadd.f32 0.0, %v102
    %104 = vmatmul.f32.gmra.mxu0 %v42
    %v105 = vpop.f32.mrf.mxu0
    %v106 = vadd.f32 0.0, %v105
    %107 = vmatmul.f32.gmra.mxu0 %v43
    %v108 = vpop.f32.mrf.mxu0
    %v109 = vadd.f32 0.0, %v108
    %110 = vmatmul.f32.gmra.mxu0 %v44
    %v111 = vpop.f32.mrf.mxu0
    %v112 = vadd.f32 0.0, %v111
    %113 = vmatmul.f32.gmra.mxu0 %v45
    %v114 = vpop.f32.mrf.mxu0
    %v115 = vadd.f32 0.0, %v114
    %116 = vmatmul.f32.gmra.mxu0 %v46
    %v117 = vpop.f32.mrf.mxu0
    %v118 = vadd.f32 0.0, %v117
    %119 = vmatmul.f32.gmra.mxu0 %v47
    %v120 = vpop.f32.mrf.mxu0
    %v121 = vadd.f32 0.0, %v120
    %122 = vmatmul.f32.gmra.mxu0 %v48
    %v123 = vpop.f32.mrf.mxu0
    %v124 = vadd.f32 0.0, %v123
    %125 = vmatmul.f32.gmra.mxu0 %v49
    %v126 = vpop.f32.mrf.mxu0
    %v127 = vadd.f32 0.0, %v126
    %128 = vmatmul.f32.gmra.mxu0 %v50
    %v129 = vpop.f32.mrf.mxu0
    %v130 = vadd.f32 0.0, %v129
    %131 = vdwg.mxu0
    %vm132 = vcmask 130048
    %v134 = vsel %vm132, %v85, 0
    %v137 = vsel %vm132, %v88, 0
    %v140 = vsel %vm132, %v91, 0
    %v143 = vsel %vm132, %v94, 0
    %v146 = vsel %vm132, %v97, 0
    %v149 = vsel %vm132, %v100, 0
    %v152 = vsel %vm132, %v103, 0
    %v155 = vsel %vm132, %v106, 0
    %v158 = vsel %vm132, %v109, 0
    %v161 = vsel %vm132, %v112, 0
    %v164 = vsel %vm132, %v115, 0
    %v167 = vsel %vm132, %v118, 0
    %v170 = vsel %vm132, %v121, 0
    %v173 = vsel %vm132, %v124, 0
    %v176 = vsel %vm132, %v127, 0
    %v179 = vsel %vm132, %v130, 0
    %181 = vmatpush.msra.mxu0 0.0
    %182 = vmatpush.msra.mxu0 0.0
    %183 = vmatpush.msra.mxu0 0.0
    %184 = vmatpush.msra.mxu0 0.0
    %185 = vmatpush.msra.mxu0 0.0
    %186 = vmatpush.msra.mxu0 0.0
    %187 = vmatpush.msra.mxu0 0.0
    %188 = vmatpush.msra.mxu0 0.0
    %189 = vmatpush.msra.mxu0 0.0
    %190 = vmatpush.msra.mxu0 0.0
    %191 = vmatpush.msra.mxu0 0.0
    %192 = vmatpush.msra.mxu0 0.0
    %193 = vmatpush.msra.mxu0 0.0
    %194 = vmatpush.msra.mxu0 0.0
    %195 = vmatpush.msra.mxu0 %v34
    %196 = vmatpush.msra.mxu0 %v33
    %197 = vmatmul.f32.gmra.mxu0 %v134
    %v198 = vpop.f32.mrf.mxu0
    %v199 = vadd.f32 0.0, %v198
    %200 = vmatmul.f32.gmra.mxu0 %v137
    %v201 = vpop.f32.mrf.mxu0
    %v202 = vadd.f32 0.0, %v201
    %203 = vmatmul.f32.gmra.mxu0 %v140
    %v204 = vpop.f32.mrf.mxu0
    %v205 = vadd.f32 0.0, %v204
    %206 = vmatmul.f32.gmra.mxu0 %v143
    %v207 = vpop.f32.mrf.mxu0
    %v208 = vadd.f32 0.0, %v207
    %209 = vmatmul.f32.gmra.mxu0 %v146
    %v210 = vpop.f32.mrf.mxu0
    %v211 = vadd.f32 0.0, %v210
    %212 = vmatmul.f32.gmra.mxu0 %v149
    %v213 = vpop.f32.mrf.mxu0
    %v214 = vadd.f32 0.0, %v213
    %215 = vmatmul.f32.gmra.mxu0 %v152
    %v216 = vpop.f32.mrf.mxu0
    %v217 = vadd.f32 0.0, %v216
    %218 = vmatmul.f32.gmra.mxu0 %v155
    %v219 = vpop.f32.mrf.mxu0
    %v220 = vadd.f32 0.0, %v219
    %221 = vmatmul.f32.gmra.mxu0 %v158
    %v222 = vpop.f32.mrf.mxu0
    %v223 = vadd.f32 0.0, %v222
    %224 = vmatmul.f32.gmra.mxu0 %v161
    %v225 = vpop.f32.mrf.mxu0
    %v226 = vadd.f32 0.0, %v225
    %227 = vmatmul.f32.gmra.mxu0 %v164
    %v228 = vpop.f32.mrf.mxu0
    %v229 = vadd.f32 0.0, %v228
    %230 = vmatmul.f32.gmra.mxu0 %v167
    %v231 = vpop.f32.mrf.mxu0
    %v232 = vadd.f32 0.0, %v231
    %233 = vmatmul.f32.gmra.mxu0 %v170
    %v234 = vpop.f32.mrf.mxu0
    %v235 = vadd.f32 0.0, %v234
    %236 = vmatmul.f32.gmra.mxu0 %v173
    %v237 = vpop.f32.mrf.mxu0
    %v238 = vadd.f32 0.0, %v237
    %239 = vmatmul.f32.gmra.mxu0 %v176
    %v240 = vpop.f32.mrf.mxu0
    %v241 = vadd.f32 0.0, %v240
    %242 = vmatmul.f32.gmra.mxu0 %v179
    %v243 = vpop.f32.mrf.mxu0
    %v244 = vadd.f32 0.0, %v243
    %245 = vdwg.mxu0
    %vm246 = vcmp.ge.f32.partialorder %v199, 0.0
    %vm247 = vcmp.ge.f32.partialorder %v202, 0.0
    %vm248 = vcmp.ge.f32.partialorder %v205, 0.0
    %vm249 = vcmp.ge.f32.partialorder %v208, 0.0
    %vm250 = vcmp.ge.f32.partialorder %v211, 0.0
    %vm251 = vcmp.ge.f32.partialorder %v214, 0.0
    %vm252 = vcmp.ge.f32.partialorder %v217, 0.0
    %vm253 = vcmp.ge.f32.partialorder %v220, 0.0
    %vm254 = vcmp.ge.f32.partialorder %v223, 0.0
    %vm255 = vcmp.ge.f32.partialorder %v226, 0.0
    %vm256 = vcmp.ge.f32.partialorder %v229, 0.0
    %vm257 = vcmp.ge.f32.partialorder %v232, 0.0
    %vm258 = vcmp.ge.f32.partialorder %v235, 0.0
    %vm259 = vcmp.ge.f32.partialorder %v238, 0.0
    %vm260 = vcmp.ge.f32.partialorder %v241, 0.0
    %vm261 = vcmp.ge.f32.partialorder %v244, 0.0
    %v262 = vmul.f32 %v199, 0.2
    %v263 = vmul.f32 %v202, 0.2
    %v264 = vmul.f32 %v205, 0.2
    %v265 = vmul.f32 %v208, 0.2
    %v266 = vmul.f32 %v211, 0.2
    %v267 = vmul.f32 %v214, 0.2
    %v268 = vmul.f32 %v217, 0.2
    %v269 = vmul.f32 %v220, 0.2
    %v270 = vmul.f32 %v223, 0.2
    %v271 = vmul.f32 %v226, 0.2
    %v272 = vmul.f32 %v229, 0.2
    %v273 = vmul.f32 %v232, 0.2
    %v274 = vmul.f32 %v235, 0.2
    %v275 = vmul.f32 %v238, 0.2
    %v276 = vmul.f32 %v241, 0.2
    %v277 = vmul.f32 %v244, 0.2
    %v278 = vsel %vm246, %v199, %v262
    %v279 = vsel %vm247, %v202, %v263
    %v280 = vsel %vm248, %v205, %v264
    %v281 = vsel %vm249, %v208, %v265
    %v282 = vsel %vm250, %v211, %v266
    %v283 = vsel %vm251, %v214, %v267
    %v284 = vsel %vm252, %v217, %v268
    %v285 = vsel %vm253, %v220, %v269
    %v286 = vsel %vm254, %v223, %v270
    %v287 = vsel %vm255, %v226, %v271
    %v288 = vsel %vm256, %v229, %v272
    %v289 = vsel %vm257, %v232, %v273
    %v290 = vsel %vm258, %v235, %v274
    %v291 = vsel %vm259, %v238, %v275
    %v292 = vsel %vm260, %v241, %v276
    %v293 = vsel %vm261, %v244, %v277
    %v294 = vld [vmem:[#allocation2] sm:$0xff]
    %v295 = vld [vmem:[#allocation2 + $0x8] sm:$0xff]
    %v296 = vld [vmem:[#allocation2 + $0x10] sm:$0xff]
    %v297 = vld [vmem:[#allocation2 + $0x18] sm:$0xff]
    %v298 = vld [vmem:[#allocation2 + $0x20] sm:$0xff]
    %v299 = vld [vmem:[#allocation2 + $0x28] sm:$0xff]
    %v300 = vld [vmem:[#allocation2 + $0x30] sm:$0xff]
    %v301 = vld [vmem:[#allocation2 + $0x38] sm:$0xff]
    %v302 = vld [vmem:[#allocation2 + $0x40] sm:$0xff]
    %v303 = vld [vmem:[#allocation2 + $0x48] sm:$0xff]
    %v304 = vld [vmem:[#allocation2 + $0x50] sm:$0xff]
    %v305 = vld [vmem:[#allocation2 + $0x58] sm:$0xff]
    %v306 = vld [vmem:[#allocation2 + $0x60] sm:$0xff]
    %v307 = vld [vmem:[#allocation2 + $0x68] sm:$0xff]
    %v308 = vld [vmem:[#allocation2 + $0x70] sm:$0xff]
    %v309 = vld [vmem:[#allocation2 + $0x78] sm:$0xff]
    %310 = vmatpush.msra.mxu0 %v293
    %311 = vmatpush.msra.mxu0 %v292
    %312 = vmatpush.msra.mxu0 %v291
    %313 = vmatpush.msra.mxu0 %v290
    %314 = vmatpush.msra.mxu0 %v289
    %315 = vmatpush.msra.mxu0 %v288
    %316 = vmatpush.msra.mxu0 %v287
    %317 = vmatpush.msra.mxu0 %v286
    %318 = vmatpush.msra.mxu0 %v285
    %319 = vmatpush.msra.mxu0 %v284
    %320 = vmatpush.msra.mxu0 %v283
    %321 = vmatpush.msra.mxu0 %v282
    %322 = vmatpush.msra.mxu0 %v281
    %323 = vmatpush.msra.mxu0 %v280
    %324 = vmatpush.msra.mxu0 %v279
    %325 = vmatpush.msra.mxu0 %v278
    %326 = vmatmul.f32.gmra.mxu0 %v294
    %v327 = vpop.f32.mrf.mxu0
    %v328 = vadd.f32 0.0, %v327
    %329 = vmatmul.f32.gmra.mxu0 %v295
    %v330 = vpop.f32.mrf.mxu0
    %v331 = vadd.f32 0.0, %v330
    %332 = vmatmul.f32.gmra.mxu0 %v296
    %v333 = vpop.f32.mrf.mxu0
    %v334 = vadd.f32 0.0, %v333
    %335 = vmatmul.f32.gmra.mxu0 %v297
    %v336 = vpop.f32.mrf.mxu0
    %v337 = vadd.f32 0.0, %v336
    %338 = vmatmul.f32.gmra.mxu0 %v298
    %v339 = vpop.f32.mrf.mxu0
    %v340 = vadd.f32 0.0, %v339
    %341 = vmatmul.f32.gmra.mxu0 %v299
    %v342 = vpop.f32.mrf.mxu0
    %v343 = vadd.f32 0.0, %v342
    %344 = vmatmul.f32.gmra.mxu0 %v300
    %v345 = vpop.f32.mrf.mxu0
    %v346 = vadd.f32 0.0, %v345
    %347 = vmatmul.f32.gmra.mxu0 %v301
    %v348 = vpop.f32.mrf.mxu0
    %v349 = vadd.f32 0.0, %v348
    %350 = vmatmul.f32.gmra.mxu0 %v302
    %v351 = vpop.f32.mrf.mxu0
    %v352 = vadd.f32 0.0, %v351
    %353 = vmatmul.f32.gmra.mxu0 %v303
    %v354 = vpop.f32.mrf.mxu0
    %v355 = vadd.f32 0.0, %v354
    %356 = vmatmul.f32.gmra.mxu0 %v304
    %v357 = vpop.f32.mrf.mxu0
    %v358 = vadd.f32 0.0, %v357
    %359 = vmatmul.f32.gmra.mxu0 %v305
    %v360 = vpop.f32.mrf.mxu0
    %v361 = vadd.f32 0.0, %v360
    %362 = vmatmul.f32.gmra.mxu0 %v306
    %v363 = vpop.f32.mrf.mxu0
    %v364 = vadd.f32 0.0, %v363
    %365 = vmatmul.f32.gmra.mxu0 %v307
    %v366 = vpop.f32.mrf.mxu0
    %v367 = vadd.f32 0.0, %v366
    %368 = vmatmul.f32.gmra.mxu0 %v308
    %v369 = vpop.f32.mrf.mxu0
    %v370 = vadd.f32 0.0, %v369
    %371 = vmatmul.f32.gmra.mxu0 %v309
    %v372 = vpop.f32.mrf.mxu0
    %v373 = vadd.f32 0.0, %v372
    %374 = vdwg.mxu0
    %v376 = vsel %vm132, %v328, 0
    %v379 = vsel %vm132, %v331, 0
    %v382 = vsel %vm132, %v334, 0
    %v385 = vsel %vm132, %v337, 0
    %v388 = vsel %vm132, %v340, 0
    %v391 = vsel %vm132, %v343, 0
    %v394 = vsel %vm132, %v346, 0
    %v397 = vsel %vm132, %v349, 0
    %v400 = vsel %vm132, %v352, 0
    %v403 = vsel %vm132, %v355, 0
    %v406 = vsel %vm132, %v358, 0
    %v409 = vsel %vm132, %v361, 0
    %v412 = vsel %vm132, %v364, 0
    %v415 = vsel %vm132, %v367, 0
    %v418 = vsel %vm132, %v370, 0
    %v421 = vsel %vm132, %v373, 0
    %423 = vmatpush.msra.mxu0 0.0
    %424 = vmatpush.msra.mxu0 0.0
    %425 = vmatpush.msra.mxu0 0.0
    %426 = vmatpush.msra.mxu0 0.0
    %427 = vmatpush.msra.mxu0 0.0
    %428 = vmatpush.msra.mxu0 0.0
    %429 = vmatpush.msra.mxu0 0.0
    %430 = vmatpush.msra.mxu0 0.0
    %431 = vmatpush.msra.mxu0 0.0
    %432 = vmatpush.msra.mxu0 0.0
    %433 = vmatpush.msra.mxu0 0.0
    %434 = vmatpush.msra.mxu0 0.0
    %435 = vmatpush.msra.mxu0 0.0
    %436 = vmatpush.msra.mxu0 0.0
    %437 = vmatpush.msra.mxu0 %v34
    %438 = vmatpush.msra.mxu0 %v33
    %439 = vmatmul.f32.gmra.mxu0 %v376
    %v440 = vpop.f32.mrf.mxu0
    %v441 = vadd.f32 0.0, %v440
    %442 = vmatmul.f32.gmra.mxu0 %v379
    %v443 = vpop.f32.mrf.mxu0
    %v444 = vadd.f32 0.0, %v443
    %445 = vmatmul.f32.gmra.mxu0 %v382
    %v446 = vpop.f32.mrf.mxu0
    %v447 = vadd.f32 0.0, %v446
    %448 = vmatmul.f32.gmra.mxu0 %v385
    %v449 = vpop.f32.mrf.mxu0
    %v450 = vadd.f32 0.0, %v449
    %451 = vmatmul.f32.gmra.mxu0 %v388
    %v452 = vpop.f32.mrf.mxu0
    %v453 = vadd.f32 0.0, %v452
    %454 = vmatmul.f32.gmra.mxu0 %v391
    %v455 = vpop.f32.mrf.mxu0
    %v456 = vadd.f32 0.0, %v455
    %457 = vmatmul.f32.gmra.mxu0 %v394
    %v458 = vpop.f32.mrf.mxu0
    %v459 = vadd.f32 0.0, %v458
    %460 = vmatmul.f32.gmra.mxu0 %v397
    %v461 = vpop.f32.mrf.mxu0
    %v462 = vadd.f32 0.0, %v461
    %463 = vmatmul.f32.gmra.mxu0 %v400
    %v464 = vpop.f32.mrf.mxu0
    %v465 = vadd.f32 0.0, %v464
    %466 = vmatmul.f32.gmra.mxu0 %v403
    %v467 = vpop.f32.mrf.mxu0
    %v468 = vadd.f32 0.0, %v467
    %469 = vmatmul.f32.gmra.mxu0 %v406
    %v470 = vpop.f32.mrf.mxu0
    %v471 = vadd.f32 0.0, %v470
    %472 = vmatmul.f32.gmra.mxu0 %v409
    %v473 = vpop.f32.mrf.mxu0
    %v474 = vadd.f32 0.0, %v473
    %475 = vmatmul.f32.gmra.mxu0 %v412
    %v476 = vpop.f32.mrf.mxu0
    %v477 = vadd.f32 0.0, %v476
    %478 = vmatmul.f32.gmra.mxu0 %v415
    %v479 = vpop.f32.mrf.mxu0
    %v480 = vadd.f32 0.0, %v479
    %481 = vmatmul.f32.gmra.mxu0 %v418
    %v482 = vpop.f32.mrf.mxu0
    %v483 = vadd.f32 0.0, %v482
    %484 = vmatmul.f32.gmra.mxu0 %v421
    %v485 = vpop.f32.mrf.mxu0
    %v486 = vadd.f32 0.0, %v485
    %487 = vdwg.mxu0
    %v488 = vpack.c.bf16 %v441, %v441
    %v489 = vpack.c.bf16 %v444, %v444
    %v490 = vpack.c.bf16 %v447, %v447
    %v491 = vpack.c.bf16 %v450, %v450
    %v492 = vpack.c.bf16 %v453, %v453
    %v493 = vpack.c.bf16 %v456, %v456
    %v494 = vpack.c.bf16 %v459, %v459
    %v495 = vpack.c.bf16 %v462, %v462
    %v496 = vpack.c.bf16 %v465, %v465
    %v497 = vpack.c.bf16 %v468, %v468
    %v498 = vpack.c.bf16 %v471, %v471
    %v499 = vpack.c.bf16 %v474, %v474
    %v500 = vpack.c.bf16 %v477, %v477
    %v501 = vpack.c.bf16 %v480, %v480
    %v502 = vpack.c.bf16 %v483, %v483
    %v503 = vpack.c.bf16 %v486, %v486
    %vm504 = vcmask 125952
    %505 = vst.msk [vmem:[%s4] sm:$0xf] %vm504, %v488
    %506 = vst.msk [vmem:[%s4 + $0x4] sm:$0xf] %vm504, %v489
    %507 = vst.msk [vmem:[%s4 + $0x8] sm:$0xf] %vm504, %v490
    %508 = vst.msk [vmem:[%s4 + $0xc] sm:$0xf] %vm504, %v491
    %509 = vst.msk [vmem:[%s4 + $0x10] sm:$0xf] %vm504, %v492
    %510 = vst.msk [vmem:[%s4 + $0x14] sm:$0xf] %vm504, %v493
    %511 = vst.msk [vmem:[%s4 + $0x18] sm:$0xf] %vm504, %v494
    %512 = vst.msk [vmem:[%s4 + $0x1c] sm:$0xf] %vm504, %v495
    %513 = vst.msk [vmem:[%s4 + $0x20] sm:$0xf] %vm504, %v496
    %514 = vst.msk [vmem:[%s4 + $0x24] sm:$0xf] %vm504, %v497
    %515 = vst.msk [vmem:[%s4 + $0x28] sm:$0xf] %vm504, %v498
    %516 = vst.msk [vmem:[%s4 + $0x2c] sm:$0xf] %vm504, %v499
    %517 = vst.msk [vmem:[%s4 + $0x30] sm:$0xf] %vm504, %v500
    %518 = vst.msk [vmem:[%s4 + $0x34] sm:$0xf] %vm504, %v501
    %519 = vst.msk [vmem:[%s4 + $0x38] sm:$0xf] %vm504, %v502
    %520 = vst.msk [vmem:[%s4 + $0x3c] sm:$0xf] %vm504, %v503
    // Predicated region
    $region22: #{tpu_custom_call.1} parent=1 // pred_check
      _
    $region23: #{tpu_custom_call.1} parent=1 // pred_check_branch
      %522 = sbr.rel (0) target = $region25
    $region24: #{tpu_custom_call.1} parent=1 // pred_region
      _
    $region25: #{tpu_custom_call.1} parent=1 // pred_fallthru
      _
    // Predicated region
    $region26: #{tpu_custom_call.1} parent=1 // pred_check
      _
    $region27: #{tpu_custom_call.1} parent=1 // pred_check_branch
      %524 = sbr.rel (0) target = $region29
    $region28: #{tpu_custom_call.1} parent=1 // pred_region
      _
    $region29: #{tpu_custom_call.1} parent=1 // pred_fallthru
      _
    %525 = vsyncpa [#allocation3], 1

</llo_original>
